<compile_context>
chip_gen: v7x
topology: tpu7x:2x2x1
jax: 0.10.0
libtpu: 0.0.40
codegen_flags: <defaults>
</compile_context>

<pallas_src>
import jax
import jax.numpy as jnp
from jax.experimental import pallas as pl
from jax.experimental.pallas import tpu as pltpu

_LANE_CANDIDATES = (2048, 1024, 512, 256, 128)  # lane-dense widths (multiples of 128)
_BLOCK_BYTES = 4 << 20        # ~4 MiB per block -> 16 MiB with 2 specs x 2 buffers
_VMEM_LIMIT_BYTES = 32 << 20  # within physical VMEM on v5e/v6e (128 MiB) and v7x (64 MiB)


def _identity_kernel(x_ref, o_ref):
    # Whole-tile copy: the "forward pass" of the empty Architecture module.
    o_ref[...] = x_ref[...]


def architecture_forward(x: jax.Array) -> jax.Array:
    """Faithful forward of the reference module: `pass` => passthrough (free)."""
    return x


def _pick_lane(total: int):
    for lane in _LANE_CANDIDATES:
        if total % lane == 0:
            return lane
    return None


def _pick_block_rows(rows: int, lane: int, itemsize: int) -> int:
    # Per-dtype sublane multiple: 8 for 4-byte, 16 for 2-byte, 32 for 1-byte.
    sub = max(1, 32 // itemsize)
    target = max(1, _BLOCK_BYTES // (lane * itemsize))
    if target >= rows:
        return rows  # single block equal to full row extent (exempt from (8,128) rule)
    target = max(sub, (target // sub) * sub)
    # Prefer a block that divides rows exactly (clean pipeline, no edge masking).
    for br in range(target, sub - 1, -sub):
        if rows % br == 0:
            return br
    return target  # partial last block handled via grid = pl.cdiv


def _forward_pallas_impl(x: jax.Array) -> jax.Array:
    """Explicit Pallas identity copy (only when a materialized copy is wanted)."""
    total = x.size
    if total == 0:
        return x

    lane = _pick_lane(total)
    if lane is None:
        # TODO(synk): ragged (non-128-multiple) sizes use the exact no-op
        # semantics of the reference forward; a masked-tail kernel would only
        # be needed if a materialized copy were contractually required.
        return x

    rows = total // lane
    itemsize = jnp.dtype(x.dtype).itemsize
    block_rows = _pick_block_rows(rows, lane, itemsize)
    grid = pl.cdiv(rows, block_rows)

    x2 = x.reshape(rows, lane)  # contiguous reshape: layout plumbing only
    out2 = pl.pallas_call(
        _identity_kernel,
        out_shape=jax.ShapeDtypeStruct((rows, lane), x.dtype),
        grid_spec=pltpu.PrefetchScalarGridSpec(
            num_scalar_prefetch=0,
            grid=(grid,),
            in_specs=[pl.BlockSpec((block_rows, lane), lambda i: (i, 0))],
            out_specs=pl.BlockSpec((block_rows, lane), lambda i: (i, 0)),
        ),
        compiler_params=pltpu.CompilerParams(
            dimension_semantics=("parallel",),
            vmem_limit_bytes=_VMEM_LIMIT_BYTES,
        ),
        cost_estimate=pl.CostEstimate(
            flops=0,
            transcendentals=0,
            bytes_accessed=2 * total * itemsize,
        ),
    )(x2)
    return out2.reshape(x.shape)


architecture_forward_pallas = jax.jit(_forward_pallas_impl)


if __name__ == "__main__":
    key = jax.random.PRNGKey(0)

    # Small NCHW-style input consistent with a conv-architecture base class.
    x = jax.random.normal(key, (2, 4, 16, 16), dtype=jnp.float32)

    # Default (faithful) forward: passthrough, zero cost.
    y = architecture_forward(x)
    assert y.shape == x.shape and y.dtype == x.dtype
    assert bool(jnp.allclose(y, x)), "passthrough forward mismatch"

    # Pallas identity-copy path (2048 elems -> lane width 2048, single block).
    y_k = architecture_forward_pallas(x)
    jax.block_until_ready(y_k)
    assert y_k.shape == x.shape and y_k.dtype == x.dtype
    assert bool(jnp.allclose(y_k, x)), "pallas identity forward mismatch"

    # Ragged shape: no 128-multiple divisor -> free passthrough (no pad/slice).
    x2 = jax.random.normal(jax.random.PRNGKey(1), (3, 5, 7, 11), dtype=jnp.float32)
    y2 = architecture_forward_pallas(x2)
    jax.block_until_ready(y2)
    assert y2.shape == x2.shape and y2.dtype == x2.dtype
    assert bool(jnp.allclose(y2, x2)), "ragged passthrough mismatch"

    print("KERNEL_OK")
</pallas_src>

<mosaic_0001>
module attributes {stable_mosaic.version = 11 : i64} {
  func.func @_identity_kernel(%arg0: i32, %arg1: memref<1x2048xf32, #tpu.memory_space<vmem>>, %arg2: memref<1x2048xf32, #tpu.memory_space<vmem>>) attributes {dimension_semantics = [#tpu.dimension_semantics<parallel>], iteration_bounds = array<i64: 1>, scalar_prefetch = 0 : i64, scratch_operands = 0 : i64, tpu.core_type = #tpu.core_type<tc>, window_params = [{transform_indices = @transform_0, window_bounds = array<i64: 1, 2048>}, {transform_indices = @transform_1, window_bounds = array<i64: 1, 2048>}]} {
    %c0 = arith.constant 0 : index
    %c0_0 = arith.constant 0 : index
    %0 = vector.load %arg1[%c0, %c0_0] : memref<1x2048xf32, #tpu.memory_space<vmem>>, vector<1x2048xf32>
    %c0_1 = arith.constant 0 : index
    %c0_2 = arith.constant 0 : index
    %1 = vector.load %arg2[%c0_1, %c0_2] : memref<1x2048xf32, #tpu.memory_space<vmem>>, vector<1x2048xf32>
    tpu.vector_store %arg2[%c0_1, %c0_2], %0 {strides = array<i32>} : memref<1x2048xf32, #tpu.memory_space<vmem>>, vector<1x2048xf32>,
    return
  }
  func.func @transform_0(%arg0: i32) -> (i32, i32) {
    %c0_i32 = arith.constant 0 : i32
    %c0_i32_0 = arith.constant 0 : i32
    return %arg0, %c0_i32 : i32, i32
  }
  func.func @transform_1(%arg0: i32) -> (i32, i32) {
    %c0_i32 = arith.constant 0 : i32
    %c0_i32_0 = arith.constant 0 : i32
    return %arg0, %c0_i32 : i32, i32
  }
}

</mosaic_0001>

<llo_original>
// kernel: _forward_pallas_impl.1
$region0: #{_forward_pallas_impl.1}
  #allocation0 [shape = 'u32[]', space=smem, size = 0x4, offset = 0x4, fixed_abs, tag = 'smem constant byte address 0x4 - core index']
  #allocation1 [shape = 'u32[144,128]{1,0:T(1,128)}', space=vmem, size = 0x12000, scoped, tag = 'internal scratch']
  %s0 = inlined_call_operand.vmem [shape: f32[1,2048], index: 0, kind: input, shape index: {}]
  %s1 = inlined_call_operand.vmem [shape: f32[1,2048], index: 1, kind: output, shape index: {}]
  %s2 = sld [smem:[#allocation0]]
  $region14: #{_forward_pallas_impl.1} parent=0
    _
  %s4 = ssub.s32 1, %s2
  %s5 = scalar_select 0, %s4, %s2
  // Predicated region
  $region2: #{_forward_pallas_impl.1} parent=0 // pred_check
    _
  $region3: #{_forward_pallas_impl.1} parent=0 // pred_check_branch
    %7 = sbr.rel (0) target = $region5
  $region4: #{_forward_pallas_impl.1} parent=0 // pred_region
    _
  $region5: #{_forward_pallas_impl.1} parent=0 // pred_fallthru
    _
  %v8 = vld [vmem:[%s0] sm:$0xff]
  %v9 = vld [vmem:[%s0 + $0x8] sm:$0xff]
  %10 = vst [vmem:[%s1] sm:$0xff] %v8
  %11 = vst [vmem:[%s1 + $0x8] sm:$0xff] %v9
  // Predicated region
  $region6: #{_forward_pallas_impl.1} parent=0 // pred_check
    _
  $region7: #{_forward_pallas_impl.1} parent=0 // pred_check_branch
    %13 = sbr.rel (0) target = $region9
  $region8: #{_forward_pallas_impl.1} parent=0 // pred_region
    _
  $region9: #{_forward_pallas_impl.1} parent=0 // pred_fallthru
    _
  // Predicated region
  $region10: #{_forward_pallas_impl.1} parent=0 // pred_check
    _
  $region11: #{_forward_pallas_impl.1} parent=0 // pred_check_branch
    %15 = sbr.rel (0) target = $region13
  $region12: #{_forward_pallas_impl.1} parent=0 // pred_region
    _
  $region13: #{_forward_pallas_impl.1} parent=0 // pred_fallthru
    _

</llo_original>
